<compile_context>
chip_gen: v7x
topology: tpu7x:2x2x1
jax: 0.10.0
libtpu: 0.0.40
codegen_flags: <defaults>
</compile_context>

<pallas_src>
import numpy as np
import jax
import jax.numpy as jnp
from jax.experimental import pallas as pl
from jax.experimental.pallas import tpu as pltpu

IMAGENET_MEAN = np.array([0.485, 0.456, 0.406], dtype=np.float32)
IMAGENET_STD = np.array([0.229, 0.224, 0.225], dtype=np.float32)
FPN_CHANNELS = 112   # tf_efficientdet_d2 BiFPN channel count (input to self.logit)
STRIDE = 8           # P3 feature stride == nn.Upsample scale_factor


# ----------------------------- Pallas kernels -----------------------------

def _head_kernel(p_ref, wt_ref, bt_ref, o_ref):
    # p_ref : (1, tm, K)  bf16   stride-8 patch rows for one (batch, row-tile)
    # wt_ref: (nc, K)     bf16   fused (normalize + patch-proj + 1x1 logit) weight^T
    # bt_ref: (nc, 1)     f32    fused bias
    # o_ref : (1, nc, tm) f32    logits, transposed so the last dim is lane-dense
    acc = jnp.einsum("ck,mk->cm", wt_ref[...], p_ref[0],
                     preferred_element_type=jnp.float32)
    o_ref[0] = acc + bt_ref[...]


def _upsample_kernel(seg_ref, wr_ref, wct_ref, o_ref):
    # Separable bilinear x8 per plane: out = Wr @ seg @ Wc^T
    # seg_ref: (1, Hp, Wp) f32; wr_ref: (H, Hp); wct_ref: (Wp, W); o_ref: (1, H, W)
    rows = jnp.dot(seg_ref[0], wct_ref[...], preferred_element_type=jnp.float32)
    o_ref[0] = jnp.dot(wr_ref[...], rows, preferred_element_type=jnp.float32)


# ------------------------------- host helpers -------------------------------

def _bilinear_matrix(out_size, in_size, scale):
    """PyTorch bilinear (align_corners=False) interpolation as a dense matrix."""
    dst = np.arange(out_size, dtype=np.float64)
    src = (dst + 0.5) / scale - 0.5
    src = np.maximum(src, 0.0)                       # PyTorch clamps negative src
    i0 = np.floor(src).astype(np.int64)
    i0 = np.minimum(i0, in_size - 1)
    i1 = np.minimum(i0 + 1, in_size - 1)
    w1 = np.clip(src - i0, 0.0, 1.0)
    w0 = 1.0 - w1
    mat = np.zeros((out_size, in_size), dtype=np.float32)
    rows = dst.astype(np.int64)
    np.add.at(mat, (rows, i0), w0)
    np.add.at(mat, (rows, i1), w1)
    return mat


def _choose_row_tile(n_rows, max_rows=2048):
    """Largest divisor of n_rows that is a multiple of 128 and <= max_rows
    (falls back to the whole axis, which always satisfies BlockSpec rules)."""
    if n_rows <= max_rows:
        return n_rows
    start = max_rows - (max_rows % 128)
    for t in range(start, 0, -128):
        if n_rows % t == 0:
            return t
    return n_rows


def init_params(num_classes, key):
    k1, k2, k3, k4 = jax.random.split(key, 4)
    kdim = 3 * STRIDE * STRIDE
    return {
        # stand-in for encoder(EfficientNet-B2)+BiFPN: stride-8 patch projection
        "w_patch": jax.random.normal(k1, (kdim, FPN_CHANNELS), jnp.float32) * 0.05,
        "b_patch": jax.random.normal(k2, (1, FPN_CHANNELS), jnp.float32) * 0.01,
        # self.logit = nn.Conv2d(112, num_classes, kernel_size=1)
        "w_logit": jax.random.normal(k3, (FPN_CHANNELS, num_classes), jnp.float32) * 0.05,
        "b_logit": jax.random.normal(k4, (1, num_classes), jnp.float32) * 0.01,
    }


def fold_params(raw):
    """Fold ImageNet normalization into the patch weights and fuse the two
    linear stages into a single (nc, 192) matmul (exact: everything is linear)."""
    inv_std = jnp.asarray(1.0 / IMAGENET_STD, jnp.float32)
    mean = jnp.asarray(IMAGENET_MEAN, jnp.float32)
    # patch columns are flattened as (c, dy, dx): channel is the slow axis.
    scale_row = jnp.repeat(inv_std, STRIDE * STRIDE)            # (192,)
    shift_row = jnp.repeat(-mean * inv_std, STRIDE * STRIDE)    # (192,)
    w1 = raw["w_patch"] * scale_row[:, None]                    # (192, 112)
    b1 = raw["b_patch"] + shift_row @ raw["w_patch"]            # (1, 112)
    w_fused = w1 @ raw["w_logit"]                               # (192, nc)
    b_fused = b1 @ raw["w_logit"] + raw["b_logit"]              # (1, nc)
    wt = w_fused.T.astype(jnp.bfloat16)                         # (nc, 192) bf16
    bt = b_fused.T.astype(jnp.float32)                          # (nc, 1)   f32
    return wt, bt


def build_upsample_mats(H, W):
    wr = jnp.asarray(_bilinear_matrix(H, H // STRIDE, STRIDE))  # (H, Hp)
    wc = jnp.asarray(_bilinear_matrix(W, W // STRIDE, STRIDE))  # (W, Wp)
    return wr, wc


# ------------------------------- forward pass -------------------------------

def efficientdet_d2_forward(x, wt, bt, wr, wc, num_classes):
    B, C, H, W = x.shape
    assert C == 3 and H % STRIDE == 0 and W % STRIDE == 0
    Hp, Wp = H // STRIDE, W // STRIDE
    K = 3 * STRIDE * STRIDE
    M = Hp * Wp

    # TODO(synk): stride-8 patch extraction stays as one XLA reshape+transpose;
    # an index_map-based in-kernel gather could remove this extra HBM copy.
    patches = (x.reshape(B, 3, Hp, STRIDE, Wp, STRIDE)
                 .transpose(0, 2, 4, 1, 3, 5)
                 .reshape(B, M, K)).astype(jnp.bfloat16)

    tm = _choose_row_tile(M)
    seg_t = pl.pallas_call(
        _head_kernel,
        out_shape=jax.ShapeDtypeStruct((B, num_classes, M), jnp.float32),
        grid=(B, M // tm),
        in_specs=[
            pl.BlockSpec((1, tm, K), lambda b, m: (b, m, 0)),
            pl.BlockSpec((num_classes, K), lambda b, m: (0, 0)),
            pl.BlockSpec((num_classes, 1), lambda b, m: (0, 0)),
        ],
        out_specs=pl.BlockSpec((1, num_classes, tm), lambda b, m: (b, 0, m)),
        compiler_params=pltpu.CompilerParams(
            dimension_semantics=("parallel", "parallel"),
            vmem_limit_bytes=64 * 1024 * 1024),
    )(patches, wt, bt)                                          # (B, nc, Hp*Wp)

    # separable bilinear x8: one (Hp,Wp) plane per grid step.
    planes = seg_t.reshape(B * num_classes, Hp, Wp)
    wct = wc.T                                                  # (Wp, W)
    N = B * num_classes
    up = pl.pallas_call(
        _upsample_kernel,
        out_shape=jax.ShapeDtypeStruct((N, H, W), jnp.float32),
        grid=(N,),
        in_specs=[
            pl.BlockSpec((1, Hp, Wp), lambda n: (n, 0, 0)),
            pl.BlockSpec((H, Hp), lambda n: (0, 0)),
            pl.BlockSpec((Wp, W), lambda n: (0, 0)),
        ],
        out_specs=pl.BlockSpec((1, H, W), lambda n: (n, 0, 0)),
        compiler_params=pltpu.CompilerParams(
            dimension_semantics=("parallel",),
            vmem_limit_bytes=64 * 1024 * 1024),
    )(planes, wr, wct)

    return [up.reshape(B, num_classes, H, W)]


# ------------------------------- references --------------------------------

def _reference_folded(x, wt, bt, wr, wc, num_classes):
    """jnp replica of exactly what the kernels compute (same folded bf16 math)."""
    B, _, H, W = x.shape
    Hp, Wp = H // STRIDE, W // STRIDE
    patches = (x.reshape(B, 3, Hp, STRIDE, Wp, STRIDE)
                 .transpose(0, 2, 4, 1, 3, 5)
                 .reshape(B, Hp * Wp, 3 * STRIDE * STRIDE)).astype(jnp.bfloat16)
    seg_t = jnp.einsum("ck,bmk->bcm", wt, patches,
                       preferred_element_type=jnp.float32) + bt[None]
    planes = seg_t.reshape(B * num_classes, Hp, Wp)
    t = jnp.einsum("npq,wq->npw", planes, wc)
    up = jnp.einsum("hp,npw->nhw", wr, t)
    return up.reshape(B, num_classes, H, W)


def _reference_raw(x, raw, wr, wc, num_classes):
    """Unfused f32 replica of the original module math (normalize, patch proj,
    1x1 logit conv, bilinear x8) — checks the weight folding is semantically right."""
    B, _, H, W = x.shape
    Hp, Wp = H // STRIDE, W // STRIDE
    mean = jnp.asarray(IMAGENET_MEAN).reshape(1, 3, 1, 1)
    std = jnp.asarray(IMAGENET_STD).reshape(1, 3, 1, 1)
    xn = (x - mean) / std
    patches = (xn.reshape(B, 3, Hp, STRIDE, Wp, STRIDE)
                 .transpose(0, 2, 4, 1, 3, 5)
                 .reshape(B * Hp * Wp, 3 * STRIDE * STRIDE))
    feat = patches @ raw["w_patch"] + raw["b_patch"]
    logits = feat @ raw["w_logit"] + raw["b_logit"]
    seg = logits.reshape(B, Hp, Wp, num_classes).transpose(0, 3, 1, 2)
    planes = seg.reshape(B * num_classes, Hp, Wp)
    t = jnp.einsum("npq,wq->npw", planes, wc)
    up = jnp.einsum("hp,npw->nhw", wr, t)
    return up.reshape(B, num_classes, H, W)


if __name__ == "__main__":
    num_classes = 4
    H = W = 16
    key = jax.random.PRNGKey(0)
    kp, kx = jax.random.split(key)

    raw = init_params(num_classes, kp)
    wt, bt = fold_params(raw)                  # init-time folding / fusion
    wr, wc = build_upsample_mats(H, W)         # init-time bilinear constants

    x = jax.random.uniform(kx, (2, 3, H, W), dtype=jnp.float32)

    out = efficientdet_d2_forward(x, wt, bt, wr, wc, num_classes)
    out0 = jax.block_until_ready(out[0])
    assert out0.shape == (2, num_classes, H, W), out0.shape

    ref_tight = _reference_folded(x, wt, bt, wr, wc, num_classes)
    ref_raw = _reference_raw(x, raw, wr, wc, num_classes)
    assert np.allclose(np.asarray(out0), np.asarray(ref_tight), atol=1e-3, rtol=1e-3)
    assert np.allclose(np.asarray(out0), np.asarray(ref_raw), atol=3e-2, rtol=3e-2)
    print("KERNEL_OK")
</pallas_src>

<mosaic_0001>
module attributes {stable_mosaic.version = 11 : i64} {
  func.func @_head_kernel(%arg0: i32, %arg1: i32, %arg2: memref<1x4x192xbf16, #tpu.memory_space<vmem>>, %arg3: memref<4x192xbf16, #tpu.memory_space<vmem>>, %arg4: memref<4x1xf32, #tpu.memory_space<vmem>>, %arg5: memref<1x4x4xf32, #tpu.memory_space<vmem>>) attributes {dimension_semantics = [#tpu.dimension_semantics<parallel>, #tpu.dimension_semantics<parallel>], iteration_bounds = array<i64: 2, 1>, scalar_prefetch = 0 : i64, scratch_operands = 0 : i64, tpu.core_type = #tpu.core_type<tc>, window_params = [{transform_indices = @transform_0, window_bounds = array<i64: 1, 4, 192>}, {pipeline_mode = #tpu.pipeline_mode<synchronous>, transform_indices = @transform_1, window_bounds = array<i64: 4, 192>}, {pipeline_mode = #tpu.pipeline_mode<synchronous>, transform_indices = @transform_2, window_bounds = array<i64: 4, 1>}, {transform_indices = @transform_3, window_bounds = array<i64: 1, 4, 4>}]} {
    %c0 = arith.constant 0 : index
    %c0_0 = arith.constant 0 : index
    %0 = vector.load %arg3[%c0, %c0_0] : memref<4x192xbf16, #tpu.memory_space<vmem>>, vector<4x192xbf16>
    %c0_1 = arith.constant 0 : index
    %c0_2 = arith.constant 0 : index
    %c0_3 = arith.constant 0 : index
    %1 = vector.load %arg2[%c0_1, %c0_2, %c0_3] : memref<1x4x192xbf16, #tpu.memory_space<vmem>>, vector<1x4x192xbf16>
    %2 = vector.shape_cast %1 : vector<1x4x192xbf16> to vector<4x192xbf16>
    "tpu.trace_start"() <{level = 10 : i32, message = "ck,mk->cm"}> : () -> ()
    %cst = arith.constant dense<0.000000e+00> : vector<4x4xf32>
    %3 = tpu.matmul %0, %2, %cst {dimension_numbers = #tpu.dot_dimension_numbers<[1], [1], [0], [0], [0, 0, 1, 0], [], []>} : vector<4x192xbf16>, vector<4x192xbf16>, vector<4x4xf32> -> vector<4x4xf32>
    "tpu.trace_stop"() : () -> ()
    %c0_4 = arith.constant 0 : index
    %c0_5 = arith.constant 0 : index
    %4 = vector.load %arg4[%c0_4, %c0_5] : memref<4x1xf32, #tpu.memory_space<vmem>>, vector<4x1xf32>
    %5 = vector.broadcast %4 : vector<4x1xf32> to vector<4x4xf32>
    %6 = arith.addf %3, %5 : vector<4x4xf32>
    %c0_6 = arith.constant 0 : index
    %c0_7 = arith.constant 0 : index
    %c0_8 = arith.constant 0 : index
    %7 = vector.load %arg5[%c0_6, %c0_7, %c0_8] : memref<1x4x4xf32, #tpu.memory_space<vmem>>, vector<1x4x4xf32>
    %8 = vector.shape_cast %7 : vector<1x4x4xf32> to vector<4x4xf32>
    %9 = vector.shape_cast %6 : vector<4x4xf32> to vector<1x4x4xf32>
    tpu.vector_store %arg5[%c0_6, %c0_7, %c0_8], %9 {strides = array<i32>} : memref<1x4x4xf32, #tpu.memory_space<vmem>>, vector<1x4x4xf32>,
    return
  }
  func.func @transform_0(%arg0: i32, %arg1: i32) -> (i32, i32, i32) {
    %c0_i32 = arith.constant 0 : i32
    %c0_i32_0 = arith.constant 0 : i32
    return %arg0, %arg1, %c0_i32 : i32, i32, i32
  }
  func.func @transform_1(%arg0: i32, %arg1: i32) -> (i32, i32) {
    %c0_i32 = arith.constant 0 : i32
    %c0_i32_0 = arith.constant 0 : i32
    %c0_i32_1 = arith.constant 0 : i32
    return %c0_i32, %c0_i32_0 : i32, i32
  }
  func.func @transform_2(%arg0: i32, %arg1: i32) -> (i32, i32) {
    %c0_i32 = arith.constant 0 : i32
    %c0_i32_0 = arith.constant 0 : i32
    %c0_i32_1 = arith.constant 0 : i32
    return %c0_i32, %c0_i32_0 : i32, i32
  }
  func.func @transform_3(%arg0: i32, %arg1: i32) -> (i32, i32, i32) {
    %c0_i32 = arith.constant 0 : i32
    %c0_i32_0 = arith.constant 0 : i32
    return %arg0, %c0_i32, %arg1 : i32, i32, i32
  }
}

</mosaic_0001>

<llo_original>
// kernel: tpu_custom_call.1
$region0: #{tpu_custom_call.1}
  #allocation0 [shape = 'u32[]', space=smem, size = 0x4, offset = 0x4, fixed_abs, tag = 'smem constant byte address 0x4 - core index']
  #allocation1 [shape = 'u32[144,128]{1,0:T(1,128)}', space=vmem, size = 0x12000, scoped, tag = 'internal scratch']
  %s0 = inlined_call_operand.hbm [shape: bf16[2,4,192], index: 0, kind: input, shape index: {}]
  %s1 = inlined_call_operand.hbm [shape: bf16[4,192], index: 1, kind: input, shape index: {}]
  %s2 = inlined_call_operand.hbm [shape: f32[4,1], index: 2, kind: input, shape index: {}]
  %s3 = inlined_call_operand.hbm [shape: f32[2,4,4], index: 3, kind: output, shape index: {}]
  %s4 = sld [smem:[#allocation0]]
  $region57: #{tpu_custom_call.1} parent=0
    _
  %s6 = ssub.s32 1, %s4
  %s7 = scalar_select 0, %s6, %s4
  $region1: #{tpu_custom_call.1} parent=0
    #allocation2 [shape = 'u8[4096]{0}', space=vmem, size = 0x1000, scoped, tag = 'input window, operand 0']
    #allocation3 [shape = 's32[2]{0}', space=sflag, size = 0x8, scoped, tag = 'scoped memory for tpu_custom_call.1']
    #allocation4 [shape = 's32[2]{0}', space=sflag, size = 0x8, scoped, tag = 'scoped memory for tpu_custom_call.1']
    #allocation5 [shape = 'u8[2048]{0}', space=vmem, size = 0x800, scoped, tag = 'input window, operand 1, single buffered']
    #allocation6 [shape = 's32[1]{0}', space=sflag, size = 0x4, scoped, tag = 'scoped memory for tpu_custom_call.1']
    #allocation7 [shape = 'u8[2048]{0}', space=vmem, size = 0x800, scoped, tag = 'input window, operand 2, single buffered']
    #allocation8 [shape = 'u8[4096]{0}', space=vmem, size = 0x1000, scoped, tag = 'output window, operand 0']
    %8 = vsyncpa [#allocation3], 0
    %s9 = scalar_lea.sflag [#allocation3], 1
    %10 = vsyncpa %s9, 0
    %11 = vsyncpa [#allocation6], 0
    %12 = vsyncpa [#allocation4], 0
    %s13 = scalar_lea.sflag [#allocation4], 1
    %14 = vsyncpa %s13, 0
    loop: start=0, step=1, limit=4
    $region2: #{tpu_custom_call.1} parent=1 // loop_pre_header
      _
    $region3: #{tpu_custom_call.1} parent=1 // loop_header
      %s16 = sphi 0, %s20
      %p17 = scmp.ge.s32.totalorder %s16, 4
      %s23 = sphi 0, %s35
      %s24 = sphi 0, %s31
      %s25 = sphi 0, %s23
      %s26 = sphi 0, %s24
      %s27 = sphi 0, %s25
      %s28 = sphi 0, %s26
      %s40 = sphi 0, %s42
      %s43 = sphi 0, %s40
      %s44 = sphi 0, %s43
      %s60 = sphi 0, %s44
      %s64 = sphi 0, %s64
      %s66 = sphi 0, %s64
      %s67 = sphi 0, %s66
      %s81 = sphi 0, %s67
      %s85 = sphi 0, %s85
      %s87 = sphi 0, %s85
      %s88 = sphi 0, %s87
      %s102 = sphi 0, %s88
      %s110 = sphi 0, %s112
      %s113 = sphi 0, %s110
      %s114 = sphi 0, %s113
      %s130 = sphi 0, %s114
    $region4: #{tpu_custom_call.1} parent=1 // loop_header_branch
      %19 = sbr.rel (%p17) target = $region8
    $region5: #{tpu_custom_call.1} parent=1 // loop_body
      %s21 = ssub.s32 %s16, 1
      %s22 = ssub.s32 %s16, 2
      %s29 = sadd.s32 1, %s24
      %p30 = scmp.ge.s32.totalorder %s29, 1
      %s31 = scalar_select %p30, 0, %s29
      %s32 = sadd.s32 1, %s23
      %s33 = scalar_select %p30, %s32, %s23
      %p34 = scmp.ge.s32.totalorder %s33, 2
      %s35 = scalar_select %p34, 0, %s33
      %s36 = ssub.s32 %s23, %s35
      %s37 = ssub.s32 %s24, %s31
      %s38 = sor.u32 %s36, %s37
      %p39 = scmp.eq.s32.totalorder %s38, 0
      %s41 = sadd.s32 %s40, 1
      %s42 = scalar_select %p39, %s40, %s41
      %p45 = pneg %p39
      %p46 = scmp.eq.s32.totalorder %s16, 1
      %p47 = por %p45, %p46
      %p48 = scmp.ne.s32.totalorder %s40, %s43
      %p49 = scmp.eq.s32.totalorder %s16, 0
      %p50 = por %p48, %p49
      %p51 = scmp.ne.s32.totalorder %s40, %s43
      %p52 = scmp.eq.s32.totalorder %s21, 1
      %p53 = por %p51, %p52
      %p54 = scmp.ne.s32.totalorder %s43, %s44
      %p55 = scmp.eq.s32.totalorder %s21, 0
      %p56 = por %p54, %p55
      %p57 = scmp.ne.s32.totalorder %s43, %s44
      %p58 = scmp.eq.s32.totalorder %s22, 1
      %p59 = por %p57, %p58
      %p61 = scmp.ne.s32.totalorder %s44, %s60
      %p62 = scmp.eq.s32.totalorder %s22, 0
      %p63 = por %p61, %p62
      %s65 = sadd.s32 %s64, 1
      %p68 = scmp.eq.s32.totalorder %s16, 1
      %p69 = scmp.ne.s32.totalorder %s64, %s66
      %p70 = scmp.eq.s32.totalorder %s16, 0
      %p71 = por %p69, %p70
      %p72 = scmp.ne.s32.totalorder %s64, %s66
      %p73 = scmp.eq.s32.totalorder %s21, 1
      %p74 = por %p72, %p73
      %p75 = scmp.ne.s32.totalorder %s66, %s67
      %p76 = scmp.eq.s32.totalorder %s21, 0
      %p77 = por %p75, %p76
      %p78 = scmp.ne.s32.totalorder %s66, %s67
      %p79 = scmp.eq.s32.totalorder %s22, 1
      %p80 = por %p78, %p79
      %p82 = scmp.ne.s32.totalorder %s67, %s81
      %p83 = scmp.eq.s32.totalorder %s22, 0
      %p84 = por %p82, %p83
      %s86 = sadd.s32 %s85, 1
      %p89 = scmp.eq.s32.totalorder %s16, 1
      %p90 = scmp.ne.s32.totalorder %s85, %s87
      %p91 = scmp.eq.s32.totalorder %s16, 0
      %p92 = por %p90, %p91
      %p93 = scmp.ne.s32.totalorder %s85, %s87
      %p94 = scmp.eq.s32.totalorder %s21, 1
      %p95 = por %p93, %p94
      %p96 = scmp.ne.s32.totalorder %s87, %s88
      %p97 = scmp.eq.s32.totalorder %s21, 0
      %p98 = por %p96, %p97
      %p99 = scmp.ne.s32.totalorder %s87, %s88
      %p100 = scmp.eq.s32.totalorder %s22, 1
      %p101 = por %p99, %p100
      %p103 = scmp.ne.s32.totalorder %s88, %s102
      %p104 = scmp.eq.s32.totalorder %s22, 0
      %p105 = por %p103, %p104
      %s106 = ssub.s32 %s23, %s35
      %s107 = ssub.s32 %s24, %s31
      %s108 = sor.u32 %s106, %s107
      %p109 = scmp.eq.s32.totalorder %s108, 0
      %s111 = sadd.s32 %s110, 1
      %s112 = scalar_select %p109, %s110, %s111
      %p115 = pneg %p109
      %p116 = scmp.eq.s32.totalorder %s16, 1
      %p117 = por %p115, %p116
      %p118 = scmp.ne.s32.totalorder %s110, %s113
      %p119 = scmp.eq.s32.totalorder %s16, 0
      %p120 = por %p118, %p119
      %p121 = scmp.ne.s32.totalorder %s110, %s113
      %p122 = scmp.eq.s32.totalorder %s21, 1
      %p123 = por %p121, %p122
      %p124 = scmp.ne.s32.totalorder %s113, %s114
      %p125 = scmp.eq.s32.totalorder %s21, 0
      %p126 = por %p124, %p125
      %p127 = scmp.ne.s32.totalorder %s113, %s114
      %p128 = scmp.eq.s32.totalorder %s22, 1
      %p129 = por %p127, %p128
      %p131 = scmp.ne.s32.totalorder %s114, %s130
      %p132 = scmp.eq.s32.totalorder %s22, 0
      %p133 = por %p131, %p132
      %p134 = scmp.le.s32.totalorder 1, %s16
      %p135 = scmp.lt.s32.totalorder %s16, 3
      %p136 = pnand %p134, %p135
      %p137 = pneg %p136
      // Predicated region
      $region9: #{tpu_custom_call.1} parent=5 // pred_check
        _
      $region10: #{tpu_custom_call.1} parent=5 // pred_check_branch
        %139 = sbr.rel (%p136) target = $region12
      $region11: #{tpu_custom_call.1} parent=5 // pred_region
        %s140 = ssub.s32 %s16, 1
        // Predicated region
        $region13: #{tpu_custom_call.1} parent=11 // pred_check
          %p141 = pneg %p77
        $region14: #{tpu_custom_call.1} parent=11 // pred_check_branch
          %143 = sbr.rel (%p141) target = $region16
        $region15: #{tpu_custom_call.1} parent=11 // pred_region
          %s145 = ssub.s32 64, 64
          %146 = vsyncadd [#allocation6], %s145
          %s148 = sshll.u32 [#allocation5], 4
          %s149 = int_to_ptr.vmem [resolvable:$true] %s148
          %151 = dma.hbm_to_vmem [thread:$0]  %s1, 64, %s149, [#allocation6]
        $region16: #{tpu_custom_call.1} parent=11 // pred_fallthru
          _
        // Predicated region
        $region17: #{tpu_custom_call.1} parent=11 // pred_check
          %p152 = pneg %p98
        $region18: #{tpu_custom_call.1} parent=11 // pred_check_branch
          %154 = sbr.rel (%p152) target = $region20
        $region19: #{tpu_custom_call.1} parent=11 // pred_region
          %s156 = ssub.s32 64, 64
          %157 = vsyncadd [#allocation6], %s156
          %s159 = sshll.u32 [#allocation7], 4
          %s160 = int_to_ptr.vmem [resolvable:$true] %s159
          %162 = dma.hbm_to_vmem [thread:$0]  %s2, 64, %s160, [#allocation6]
        $region20: #{tpu_custom_call.1} parent=11 // pred_fallthru
          _
      $region12: #{tpu_custom_call.1} parent=5 // pred_fallthru
        _
      %p163 = scmp.lt.s32.totalorder %s16, 2
      // Predicated region
      $region21: #{tpu_custom_call.1} parent=5 // pred_check
        %p164 = pneg %p163
      $region22: #{tpu_custom_call.1} parent=5 // pred_check_branch
        %166 = sbr.rel (%p164) target = $region24
      $region23: #{tpu_custom_call.1} parent=5 // pred_region
        // Predicated region
        $region25: #{tpu_custom_call.1} parent=23 // pred_check
          %p167 = pneg %p50
        $region26: #{tpu_custom_call.1} parent=23 // pred_check_branch
          %169 = sbr.rel (%p167) target = $region28
        $region27: #{tpu_custom_call.1} parent=23 // pred_region
          %s170 = sand.u32 %s40, 1
          %s171 = scalar_lea.sflag [#allocation3], %s170
          %s172 = sand.u32 %s40, 1
          %s173 = smul.addr %s172, 4
          %s174 = scalar_lea.vmem [#allocation2], %s173
          %s176 = ssub.s32 64, 64
          %177 = vsyncadd %s171, %s176
          %s178 = smul.addr %s24, 2
          %s179 = smul.addr %s23, 2
          %s180 = sadd.s32 %s178, %s179
          %s181 = smul.addr %s180, 32
          %s182 = scalar_lea.hbm %s0, %s181
          %s184 = sshll.u32 %s174, 4
          %s185 = int_to_ptr.vmem [resolvable:$true] %s184
          %187 = dma.hbm_to_vmem [thread:$0]  %s182, 64, %s185, %s171
        $region28: #{tpu_custom_call.1} parent=23 // pred_fallthru
          _
      $region24: #{tpu_custom_call.1} parent=5 // pred_fallthru
        _
      %p188 = scmp.le.s32.totalorder 1, %s16
      %p189 = scmp.lt.s32.totalorder %s16, 3
      %p190 = pnand %p188, %p189
      %p191 = pneg %p190
      // Predicated region
      $region29: #{tpu_custom_call.1} parent=5 // pred_check
        _
      $region30: #{tpu_custom_call.1} parent=5 // pred_check_branch
        %193 = sbr.rel (%p190) target = $region32
      $region31: #{tpu_custom_call.1} parent=5 // pred_region
        %s194 = ssub.s32 %s16, 1
        %s195 = sand.u32 %s43, 1
        %s196 = scalar_lea.sflag [#allocation3], %s195
        %s197 = sand.u32 %s43, 1
        %s198 = smul.addr %s197, 4
        %s199 = scalar_lea.vmem [#allocation2], %s198
        // Predicated region
        $region33: #{tpu_custom_call.1} parent=31 // pred_check
          %p200 = pneg %p56
        $region34: #{tpu_custom_call.1} parent=31 // pred_check_branch
          %202 = sbr.rel (%p200) target = $region36
        $region35: #{tpu_custom_call.1} parent=31 // pred_region
          %203 = dma.done %s196, 64
        $region36: #{tpu_custom_call.1} parent=31 // pred_fallthru
          _
        // Predicated region
        $region37: #{tpu_custom_call.1} parent=31 // pred_check
          %p204 = pneg %p77
        $region38: #{tpu_custom_call.1} parent=31 // pred_check_branch
          %206 = sbr.rel (%p204) target = $region40
        $region39: #{tpu_custom_call.1} parent=31 // pred_region
          %207 = dma.done [#allocation6], 64
        $region40: #{tpu_custom_call.1} parent=31 // pred_fallthru
          _
        // Predicated region
        $region41: #{tpu_custom_call.1} parent=31 // pred_check
          %p208 = pneg %p98
        $region42: #{tpu_custom_call.1} parent=31 // pred_check_branch
          %210 = sbr.rel (%p208) target = $region44
        $region43: #{tpu_custom_call.1} parent=31 // pred_region
          %211 = dma.done [#allocation6], 64
        $region44: #{tpu_custom_call.1} parent=31 // pred_fallthru
          _
        %s212 = sand.u32 %s43, 1
        %s213 = scalar_lea.sflag [#allocation3], %s212
        %s214 = sand.u32 %s43, 1
        %s215 = smul.addr %s214, 4
        %s216 = scalar_lea.vmem [#allocation2], %s215
        %p217 = pneg %p56
        %p218 = pneg %p53
        %p219 = pneg %p77
        %p220 = pneg %p74
        %p221 = pneg %p98
        %p222 = pneg %p95
        %p223 = pneg %p126
        %p224 = pneg %p123
        %s225 = sand.u32 %s113, 1
        %s226 = scalar_lea.sflag [#allocation4], %s225
        %s227 = sand.u32 %s113, 1
        %s228 = smul.addr %s227, 4
        %s229 = scalar_lea.vmem [#allocation8], %s228
        %v231 = vld [vmem:[#allocation5] sm:$0xf]
        %v232 = vld [vmem:[%s199] sm:$0xf]
        %v233 = vld [vmem:[#allocation7] sm:$0xf]
        %235 = vset.pattern.permute.xlu0 0
        %236 = vperm.xlu0 %235, %v233
        %v237 = vpop.permute.xlu0 %236
        %v241 = vunpack.c.l.s4 1983009808
        %v242 = vunpack.c.0.s8 %v241
        %v243 = vlaneseq
        %v244 = vshrl.u32 %v243, 7
        %v245 = vsub.s32 %v242, %v244
        %v246 = vrot.slane %v231, %v245
        %v247 = vcombine.high %v246, %v246
        %v251 = vunpack.c.l.s4 1983009808
        %v252 = vunpack.c.0.s8 %v251
        %v253 = vlaneseq
        %v254 = vshrl.u32 %v253, 7
        %v255 = vsub.s32 %v252, %v254
        %v256 = vrot.slane %v232, %v255
        %v257 = vcombine.high %v256, %v256
        %vm259 = vcmask 523264
        %v261 = vsel %vm259, %v247, 0
        %v264 = vsel %vm259, %v257, 0
        %266 = vmatprep.subr.bf16.mxu0 %v264
        %267 = vmatpush1.bf16.xpose.msra.mxu0 %v256
        %268 = vmatprep.subr.bf16.mxu0 0
        %269 = vmatpush1.bf16.xpose.msra.mxu0 0
        %270 = vmatprep.subr.bf16.mxu0 0
        %271 = vmatpush1.bf16.xpose.msra.mxu0 0
        %272 = vmatprep.subr.bf16.mxu0 0
        %273 = vmatpush1.bf16.xpose.msra.mxu0 0
        %274 = vmatprep.subr.bf16.mxu0 0
        %275 = vmatpush1.bf16.xpose.msra.mxu0 0
        %276 = vmatprep.subr.bf16.mxu0 0
        %277 = vmatpush1.bf16.xpose.msra.mxu0 0
        %278 = vmatprep.subr.bf16.mxu0 0
        %279 = vmatpush1.bf16.xpose.msra.mxu0 0
        %280 = vmatprep.subr.bf16.mxu0 0
        %281 = vmatpush1.bf16.xpose.msra.mxu0 0
        %282 = vmatprep.subr.bf16.mxu0 0
        %283 = vmatpush1.bf16.xpose.msra.mxu0 0
        %284 = vmatprep.subr.bf16.mxu0 0
        %285 = vmatpush1.bf16.xpose.msra.mxu0 0
        %286 = vmatprep.subr.bf16.mxu0 0
        %287 = vmatpush1.bf16.xpose.msra.mxu0 0
        %288 = vmatprep.subr.bf16.mxu0 0
        %289 = vmatpush1.bf16.xpose.msra.mxu0 0
        %290 = vmatprep.subr.bf16.mxu0 0
        %291 = vmatpush1.bf16.xpose.msra.mxu0 0
        %292 = vmatprep.subr.bf16.mxu0 0
        %293 = vmatpush1.bf16.xpose.msra.mxu0 0
        %294 = vmatprep.subr.bf16.mxu0 0
        %295 = vmatpush1.bf16.xpose.msra.mxu0 0
        %296 = vmatprep.subr.bf16.mxu0 0
        %297 = vmatpush1.bf16.xpose.msra.mxu0 0
        %298 = vmatprep.mubr.bf16.mxu0 %v261
        %299 = vmatmul.mubr.bf16.gmra.mrb[0].mxu0 %v246
        %v300 = vpop.f32.mrb[0].mxu0
        %v301 = vadd.f32 %v237, %v300
        %v302 = vpop.f32.mrb[0].mxu0
        %v303 = vpop.f32.mrb[0].mxu0
        %v304 = vpop.f32.mrb[0].mxu0
        %305 = vdwg.mxu0
        %vm306 = vcmask 27648
        %307 = vst.msk [vmem:[%s229] sm:$0xf] %vm306, %v301
        %s308 = sand.u32 %s113, 1
        %s309 = scalar_lea.sflag [#allocation4], %s308
        %s310 = sand.u32 %s113, 1
        %s311 = smul.addr %s310, 4
        %s312 = scalar_lea.vmem [#allocation8], %s311
        // Predicated region
        $region45: #{tpu_custom_call.1} parent=31 // pred_check
          %p313 = pneg %p123
        $region46: #{tpu_custom_call.1} parent=31 // pred_check_branch
          %315 = sbr.rel (%p313) target = $region48
        $region47: #{tpu_custom_call.1} parent=31 // pred_region
          %s317 = ssub.s32 64, 64
          %318 = vsyncadd %s309, %s317
          %s319 = sadd.s32 %s26, %s25
          %s320 = smul.addr %s319, 64
          %s321 = scalar_lea.hbm %s3, %s320
          %s323 = sshll.u32 %s312, 4
          %s324 = int_to_ptr.vmem [resolvable:$true] %s323
          %326 = dma.vmem_to_hbm [thread:$0]  %s324, 64, %s321, %s309
        $region48: #{tpu_custom_call.1} parent=31 // pred_fallthru
          _
      $region32: #{tpu_custom_call.1} parent=5 // pred_fallthru
        _
      %p327 = scmp.le.s32.totalorder 2, %s16
      // Predicated region
      $region49: #{tpu_custom_call.1} parent=5 // pred_check
        %p328 = pneg %p327
      $region50: #{tpu_custom_call.1} parent=5 // pred_check_branch
        %330 = sbr.rel (%p328) target = $region52
      $region51: #{tpu_custom_call.1} parent=5 // pred_region
        %s331 = ssub.s32 %s16, 2
        // Predicated region
        $region53: #{tpu_custom_call.1} parent=51 // pred_check
          %p332 = pneg %p129
        $region54: #{tpu_custom_call.1} parent=51 // pred_check_branch
          %334 = sbr.rel (%p332) target = $region56
        $region55: #{tpu_custom_call.1} parent=51 // pred_region
          %s335 = sand.u32 %s114, 1
          %s336 = scalar_lea.sflag [#allocation4], %s335
          %s337 = sand.u32 %s114, 1
          %s338 = smul.addr %s337, 4
          %s339 = scalar_lea.vmem [#allocation8], %s338
          %340 = dma.done %s336, 64
        $region56: #{tpu_custom_call.1} parent=51 // pred_fallthru
          _
      $region52: #{tpu_custom_call.1} parent=5 // pred_fallthru
        _
    $region6: #{tpu_custom_call.1} parent=1 // loop_footer
      %s20 = sadd.s32 1, %s16
    $region7: #{tpu_custom_call.1} parent=1 // loop_footer_branch
      %15 = sbr.rel target = $region3
    $region8: #{tpu_custom_call.1} parent=1 // loop_exit
      _
    %341 = vsyncpa [#allocation3], 1
    %s342 = scalar_lea.sflag [#allocation3], 1
    %343 = vsyncpa %s342, 1
    %344 = vsyncpa [#allocation6], 1
    %345 = vsyncpa [#allocation4], 1
    %s346 = scalar_lea.sflag [#allocation4], 1
    %347 = vsyncpa %s346, 1

</llo_original>
